<compile_context>
chip_gen: v6e
topology: v6e:2x2x1
jax: 0.10.0
libtpu: 0.0.40
codegen_flags: <defaults>
</compile_context>

<pallas_src>
import functools

import jax
import jax.numpy as jnp
from jax.experimental import pallas as pl
from jax.experimental.pallas import tpu as pltpu

BN_EPS = 1e-5                  # torch BatchNorm default eps
_ROW_TILE_TARGET = 2048        # row tile for the (rows, C) streaming kernels
_N_TILE_TARGET = 256           # query-point tile for the kNN / softmax kernels
_KNN_VMEM_LIMIT = 64 * 1024 * 1024


def _gelu(x):
    # tanh approximation of GELU (see TODO above).
    c = 0.7978845608028654  # sqrt(2/pi)
    return 0.5 * x * (1.0 + jnp.tanh(c * (x + 0.044715 * x * x * x)))


# ---------------------------------------------------------------------------
# Tiling helpers
# ---------------------------------------------------------------------------
def _row_tiling(r, target=_ROW_TILE_TARGET):
    """Return (tile, padded_rows): tile is a multiple of 8, padded_rows a multiple of tile."""
    if r <= target:
        t = -(-r // 8) * 8
        return t, t
    t = (target // 8) * 8
    while t >= 8:
        if r % t == 0:
            return t, r
        t -= 8
    t = (target // 8) * 8
    return t, -(-r // t) * t


def _pick_div_tile(n, target=_N_TILE_TARGET):
    """Largest tile <= target that divides n and is a multiple of 8 (or n itself)."""
    if n <= target:
        return n
    t = (target // 8) * 8
    while t >= 8:
        if n % t == 0:
            return t
        t -= 8
    # TODO(synk): awkward N falls back to a full-N tile; production should pad queries.
    return n


def _pad_rows(x, rp):
    r = x.shape[0]
    if rp == r:
        return x
    return jnp.pad(x, ((0, rp - r), (0, 0)))


def _row_mask(tr, r_valid):
    rid = pl.program_id(0) * tr + jax.lax.broadcasted_iota(jnp.int32, (tr, 1), 0)
    return (rid < r_valid).astype(jnp.float32)


# ---------------------------------------------------------------------------
# Row-wise kernels (fused BN(scale,shift)+GELU prologues, per-tile partial stats)
# ---------------------------------------------------------------------------
def _linear_pstats_kernel(x_ref, wt_ref, b_ref, y_ref, ps_ref, pq_ref, *, tr, r_valid):
    y = jnp.dot(x_ref[...], wt_ref[...], preferred_element_type=jnp.float32) + b_ref[...]
    y_ref[...] = y
    m = _row_mask(tr, r_valid)
    ym = y * m
    ps_ref[...] = jnp.sum(ym, axis=0, keepdims=True)[None]
    pq_ref[...] = jnp.sum(ym * y, axis=0, keepdims=True)[None]


def _bn_gelu_linear_kernel(y_ref, sc_ref, sh_ref, wt_ref, b_ref, o_ref):
    x = _gelu(y_ref[...] * sc_ref[...] + sh_ref[...])
    o_ref[...] = jnp.dot(x, wt_ref[...], preferred_element_type=jnp.float32) + b_ref[...]


def _bn_gelu_linear_pstats_kernel(y_ref, sc_ref, sh_ref, wt_ref, b_ref,
                                  o_ref, ps_ref, pq_ref, *, tr, r_valid):
    x = _gelu(y_ref[...] * sc_ref[...] + sh_ref[...])
    o = jnp.dot(x, wt_ref[...], preferred_element_type=jnp.float32) + b_ref[...]
    o_ref[...] = o
    m = _row_mask(tr, r_valid)
    om = o * m
    ps_ref[...] = jnp.sum(om, axis=0, keepdims=True)[None]
    pq_ref[...] = jnp.sum(om * o, axis=0, keepdims=True)[None]


def _bn_gelu_linear_add_pstats_kernel(y_ref, add_ref, sc_ref, sh_ref, wt_ref, b_ref,
                                      o_ref, s_ref, ps_ref, pq_ref, *, tr, r_valid):
    # pos_enc = fc_delta2(gelu(bn_delta(p1)));  g0 = (q - key) + pos_enc  (+ bg1 stats)
    x = _gelu(y_ref[...] * sc_ref[...] + sh_ref[...])
    o = jnp.dot(x, wt_ref[...], preferred_element_type=jnp.float32) + b_ref[...]
    o_ref[...] = o
    s = o + add_ref[...]
    s_ref[...] = s
    m = _row_mask(tr, r_valid)
    sm = s * m
    ps_ref[...] = jnp.sum(sm, axis=0, keepdims=True)[None]
    pq_ref[...] = jnp.sum(sm * s, axis=0, keepdims=True)[None]


def _bn_gelu_res_kernel(y_ref, res_ref, sc_ref, sh_ref, o_ref):
    o_ref[...] = res_ref[...] + _gelu(y_ref[...] * sc_ref[...] + sh_ref[...])


def _row_call(kernel_fn, row_inputs, const_inputs, row_out_channels, stat_channels):
    """Row-tiled pallas_call.

    row_inputs:  (R, Ci) arrays tiled along rows (padded to a tile multiple).
    const_inputs: small 2-D arrays broadcast to every tile (weights, bias, scale/shift).
    row_out_channels: channel counts of the full (R, C) outputs.
    stat_channels: if not None, append a pair of (nt, 1, C) per-tile partial sum/sumsq
                   outputs (padded rows masked out inside the kernel).
    Kernel ref order: *row_inputs, *const_inputs, *row_outs[, psum, psq].
    """
    r = row_inputs[0].shape[0]
    tr, rp = _row_tiling(r)
    nt = rp // tr
    padded = [_pad_rows(jnp.asarray(x, jnp.float32), rp) for x in row_inputs]
    consts = [jnp.asarray(c, jnp.float32) for c in const_inputs]

    in_specs = ([pl.BlockSpec((tr, x.shape[1]), lambda i: (i, 0)) for x in padded]
                + [pl.BlockSpec(c.shape, lambda i: (0, 0)) for c in consts])
    out_shape = [jax.ShapeDtypeStruct((rp, c), jnp.float32) for c in row_out_channels]
    out_specs = [pl.BlockSpec((tr, c), lambda i: (i, 0)) for c in row_out_channels]
    if stat_channels is not None:
        out_shape += [jax.ShapeDtypeStruct((nt, 1, stat_channels), jnp.float32)] * 2
        out_specs += [pl.BlockSpec((1, 1, stat_channels), lambda i: (i, 0, 0))] * 2
        kernel_fn = functools.partial(kernel_fn, tr=tr, r_valid=r)

    outs = pl.pallas_call(
        kernel_fn,
        grid=(nt,),
        out_shape=tuple(out_shape),
        in_specs=in_specs,
        out_specs=tuple(out_specs),
        compiler_params=pltpu.CompilerParams(dimension_semantics=("parallel",)),
    )(*padded, *consts)
    outs = list(outs) if isinstance(outs, (tuple, list)) else [outs]
    if rp != r:
        for idx in range(len(row_out_channels)):
            outs[idx] = outs[idx][:r]
    return outs


def _bn_scale_shift(psum, psq, gamma, beta, n_rows):
    """Per-channel scale/shift from partial sums: x*scale + shift == (x-mean)*rsqrt(var+eps)*g + b."""
    s = jnp.sum(psum, axis=tuple(range(psum.ndim - 1)))
    q = jnp.sum(psq, axis=tuple(range(psq.ndim - 1)))
    mean = s / n_rows
    var = jnp.maximum(q / n_rows - mean * mean, 0.0)
    # TODO(synk): E[x^2]-mean^2 can cancel for very large row counts; switch to a
    #             per-tile Welford merge if production row counts grow beyond ~1e6.
    scale = jnp.asarray(gamma, jnp.float32) * jax.lax.rsqrt(var + BN_EPS)
    shift = jnp.asarray(beta, jnp.float32) - mean * scale
    c = scale.shape[0]
    return scale.reshape(1, c), shift.reshape(1, c)


# ---------------------------------------------------------------------------
# kNN + gathers: pos = p_q - p_knn, qk = q - key_knn, v_knn
# Point-major, lane-dense outputs: (B, N, k*P), (B, N, k*D), (B, N, k*D).
# ---------------------------------------------------------------------------
def _knn_gather_kernel(pq_ref, prt_ref, q_ref, refcat_ref, pos_ref, qk_ref, vk_ref,
                       *, k_neighbors, p_dim, d_feats):
    pq = pq_ref[0]            # (tn, P)    query points tile
    prt = prt_ref[0]          # (P, N)     reference points, transposed
    q = q_ref[0]              # (tn, D)    query features tile
    refcat = refcat_ref[0]    # (N, P+2D)  [points | key | value] for all reference points

    tn = pq.shape[0]
    n = refcat.shape[0]

    # Exact squared distances via per-coordinate VPU broadcasts (no MXU, no sqrt).
    d2 = jnp.zeros((tn, n), jnp.float32)
    for c in range(p_dim):
        diff = pq[:, c:c + 1] - prt[c:c + 1, :]
        d2 = d2 + diff * diff

    col = jax.lax.broadcasted_iota(jnp.int32, (tn, n), 1).astype(jnp.float32)
    big = jnp.float32(n)
    work = d2
    pos_slabs, qk_slabs, vk_slabs = [], [], []
    # TODO(synk): the argmin costs two cross-lane min reductions per neighbor (exact
    #             value + lowest-index tie break). A packed distance+index key would
    #             halve the XLU reductions but is not bit-exact against lax.top_k, so
    #             the exact two-pass form is kept for the numeric-check build.
    for _ in range(k_neighbors):
        dmin = jnp.min(work, axis=1, keepdims=True)
        first = jnp.min(jnp.where(work == dmin, col, big), axis=1, keepdims=True)
        onehot = (col == first).astype(jnp.float32)
        # ONE one-hot MXU matmul gathers points/key/value together (exact: 1.0 * x).
        g = jnp.dot(onehot, refcat, preferred_element_type=jnp.float32)
        pos_slabs.append(pq - g[:, :p_dim])
        qk_slabs.append(q - g[:, p_dim:p_dim + d_feats])
        vk_slabs.append(g[:, p_dim + d_feats:])
        work = jnp.where(onehot > 0.0, jnp.float32(jnp.inf), work)

    # Lane-dense stores: one (tn, k*C) slab per output instead of k narrow stores.
    pos_ref[0] = jnp.concatenate(pos_slabs, axis=-1)
    qk_ref[0] = jnp.concatenate(qk_slabs, axis=-1)
    vk_ref[0] = jnp.concatenate(vk_slabs, axis=-1)


def knn_gather(points, q_all, kv_all, k_neighbors):
    B, N, P = points.shape
    D = q_all.shape[-1]
    tn = _pick_div_tile(N)
    nt = N // tn
    ccat = P + 2 * D
    points = points.astype(jnp.float32)
    refcat = jnp.concatenate([points, kv_all.astype(jnp.float32)], axis=-1)  # (B, N, P+2D)
    points_t = jnp.transpose(points, (0, 2, 1))                              # (B, P, N)
    kern = functools.partial(_knn_gather_kernel, k_neighbors=k_neighbors,
                             p_dim=P, d_feats=D)
    return pl.pallas_call(
        kern,
        grid=(B, nt),
        out_shape=(jax.ShapeDtypeStruct((B, N, k_neighbors * P), jnp.float32),
                   jax.ShapeDtypeStruct((B, N, k_neighbors * D), jnp.float32),
                   jax.ShapeDtypeStruct((B, N, k_neighbors * D), jnp.float32)),
        in_specs=[pl.BlockSpec((1, tn, P), lambda b, i: (b, i, 0)),
                  pl.BlockSpec((1, P, N), lambda b, i: (b, 0, 0)),
                  pl.BlockSpec((1, tn, D), lambda b, i: (b, i, 0)),
                  pl.BlockSpec((1, N, ccat), lambda b, i: (b, 0, 0))],
        out_specs=(pl.BlockSpec((1, tn, k_neighbors * P), lambda b, i: (b, i, 0)),
                   pl.BlockSpec((1, tn, k_neighbors * D), lambda b, i: (b, i, 0)),
                   pl.BlockSpec((1, tn, k_neighbors * D), lambda b, i: (b, i, 0))),
        compiler_params=pltpu.CompilerParams(
            dimension_semantics=("parallel", "parallel"),
            vmem_limit_bytes=_KNN_VMEM_LIMIT),
    )(points, points_t, q_all.astype(jnp.float32), refcat)


# ---------------------------------------------------------------------------
# softmax over k + weighted sum with (value_knn + pos_enc) + bn2 partial stats
# (point-major lane-dense (B, N, k*D) inputs; grid (B, nt), both axes parallel)
# ---------------------------------------------------------------------------
def _softmax_attend_kernel(g_ref, v_ref, pe_ref, o_ref, ps_ref, pq_ref,
                           *, k_neighbors, d_feats):
    D = d_feats
    g = g_ref[0]   # (tn, k*D)
    v = v_ref[0]
    pe = pe_ref[0]

    slabs = [g[:, j * D:(j + 1) * D] for j in range(k_neighbors)]
    m = slabs[0]
    for j in range(1, k_neighbors):
        m = jnp.maximum(m, slabs[j])
    exps = [jnp.exp(s - m) for s in slabs]
    denom = exps[0]
    for e in exps[1:]:
        denom = denom + e
    # TODO(synk): production builds should use pl.reciprocal(denom, approx=True) (EUP);
    #             exact divide kept here for the numeric check.
    inv = 1.0 / denom

    out = jnp.zeros_like(m)
    for j in range(k_neighbors):
        out = out + (exps[j] * inv) * (v[:, j * D:(j + 1) * D] + pe[:, j * D:(j + 1) * D])
    o_ref[0] = out
    ps_ref[...] = jnp.sum(out, axis=0, keepdims=True)[None, None]
    pq_ref[...] = jnp.sum(out * out, axis=0, keepdims=True)[None, None]


def softmax_attend(g_pm, vk_pm, pe_pm, k_neighbors):
    B, N, KD = g_pm.shape
    D = KD // k_neighbors
    tn = _pick_div_tile(N)
    nt = N // tn
    kern = functools.partial(_softmax_attend_kernel, k_neighbors=k_neighbors, d_feats=D)
    spec_kd = pl.BlockSpec((1, tn, KD), lambda b, i: (b, i, 0))
    return pl.pallas_call(
        kern,
        grid=(B, nt),
        out_shape=(jax.ShapeDtypeStruct((B, N, D), jnp.float32),
                   jax.ShapeDtypeStruct((B, nt, 1, D), jnp.float32),
                   jax.ShapeDtypeStruct((B, nt, 1, D), jnp.float32)),
        in_specs=[spec_kd, spec_kd, spec_kd],
        out_specs=(pl.BlockSpec((1, tn, D), lambda b, i: (b, i, 0)),
                   pl.BlockSpec((1, 1, 1, D), lambda b, i: (b, i, 0, 0)),
                   pl.BlockSpec((1, 1, 1, D), lambda b, i: (b, i, 0, 0))),
        compiler_params=pltpu.CompilerParams(
            dimension_semantics=("parallel", "parallel")),
    )(g_pm.astype(jnp.float32), vk_pm.astype(jnp.float32), pe_pm.astype(jnp.float32))


# ---------------------------------------------------------------------------
# PointTransformerBlock forward
# ---------------------------------------------------------------------------
def point_transformer_block(params, feats, points, k_neighbors):
    B, N, D = feats.shape
    P = points.shape[-1]
    feats = feats.astype(jnp.float32)
    points = points.astype(jnp.float32)
    R = B * N
    rows_in = feats.reshape(R, D)

    def wt(w):    # torch Linear weight (out, in) -> (in, out)
        return jnp.asarray(w, jnp.float32).T

    def bias(b):
        return jnp.asarray(b, jnp.float32).reshape(1, -1)

    # --- fc1 (+ bn1 partial stats) ---
    y1, s1, q1 = _row_call(_linear_pstats_kernel, [rows_in],
                           [wt(params["fc1_w"]), bias(params["fc1_b"])], [D], D)
    sc1, sh1 = _bn_scale_shift(s1, q1, params["bn1_g"], params["bn1_b"], R)

    # --- bn1+GELU fused into a single q|k|v linear (concatenated weights) ---
    qkv_wt = jnp.concatenate([wt(params["q_w"]), wt(params["k_w"]), wt(params["v_w"])], axis=1)
    qkv_b = jnp.concatenate([bias(params["q_b"]), bias(params["k_b"]), bias(params["v_b"])], axis=1)
    (qkv,) = _row_call(_bn_gelu_linear_kernel, [y1], [sc1, sh1, qkv_wt, qkv_b], [3 * D], None)
    qkv3 = qkv.reshape(B, N, 3 * D)
    q_all = qkv3[..., :D]
    kv_all = qkv3[..., D:]          # [key | value], kept concatenated for the gather matmul

    # --- kNN + gathers (point-major lane-dense outputs) ---
    pos_pm, qk_pm, vk_pm = knn_gather(points, q_all, kv_all, k_neighbors)
    R2 = B * N * k_neighbors
    pos_rows = pos_pm.reshape(R2, P)   # pure views: rows ordered (b, n, neighbor)
    qk_rows = qk_pm.reshape(R2, D)

    # --- fc_delta1 (+ bn_delta partial stats) ---
    p1, sd, qd = _row_call(_linear_pstats_kernel, [pos_rows],
                           [wt(params["d1_w"]), bias(params["d1_b"])], [P], P)
    scd, shd = _bn_scale_shift(sd, qd, params["bnd_g"], params["bnd_b"], R2)

    # --- bn_delta+GELU -> fc_delta2, fused with (q - key) add and bn_gamma1 stats ---
    pos_enc, g0, sg1, qg1 = _row_call(
        _bn_gelu_linear_add_pstats_kernel, [p1, qk_rows],
        [scd, shd, wt(params["d2_w"]), bias(params["d2_b"])], [D, D], D)
    scg1, shg1 = _bn_scale_shift(sg1, qg1, params["bg1_g"], params["bg1_b"], R2)

    # --- bn_gamma1+GELU -> fc_gamma1 (+ bn_gamma2 stats) ---
    g2, sg2, qg2 = _row_call(_bn_gelu_linear_pstats_kernel, [g0],
                             [scg1, shg1, wt(params["g1_w"]), bias(params["g1_b"])], [D], D)
    scg2, shg2 = _bn_scale_shift(sg2, qg2, params["bg2_g"], params["bg2_b"], R2)

    # --- bn_gamma2+GELU -> fc_gamma2 ---
    (g4,) = _row_call(_bn_gelu_linear_kernel, [g2],
                      [scg2, shg2, wt(params["g2_w"]), bias(params["g2_b"])], [D], None)

    # --- softmax over k + weighted sum with (value + pos_enc), fused with bn2 stats ---
    attn, s2, q2 = softmax_attend(g4.reshape(B, N, k_neighbors * D), vk_pm,
                                  pos_enc.reshape(B, N, k_neighbors * D), k_neighbors)
    sc2, sh2 = _bn_scale_shift(s2, q2, params["bn2_g"], params["bn2_b"], R)

    # --- bn2+GELU -> fc2 (+ bn3 stats) ---
    h2, s3, q3 = _row_call(_bn_gelu_linear_pstats_kernel, [attn.reshape(R, D)],
                           [sc2, sh2, wt(params["fc2_w"]), bias(params["fc2_b"])], [D], D)
    sc3, sh3 = _bn_scale_shift(s3, q3, params["bn3_g"], params["bn3_b"], R)

    # --- bn3+GELU + residual ---
    (out,) = _row_call(_bn_gelu_res_kernel, [h2, rows_in], [sc3, sh3], [D], None)
    return out.reshape(B, N, D), points


# ---------------------------------------------------------------------------
# Parameter init + pure-JAX reference
# ---------------------------------------------------------------------------
def init_params(key, d_points, d_feats):
    keys = jax.random.split(key, 10)

    def lin(k, cout, cin):
        kw, kb = jax.random.split(k)
        return (0.2 * jax.random.normal(kw, (cout, cin), jnp.float32),
                0.1 * jax.random.normal(kb, (cout,), jnp.float32))

    def bn(c, lo, hi):
        return (jnp.linspace(lo, hi, c, dtype=jnp.float32),
                jnp.linspace(-0.1, 0.1, c, dtype=jnp.float32))

    p = {}
    p["fc1_w"], p["fc1_b"] = lin(keys[0], d_feats, d_feats)
    p["fc2_w"], p["fc2_b"] = lin(keys[1], d_feats, d_feats)
    p["bn1_g"], p["bn1_b"] = bn(d_feats, 0.8, 1.2)
    p["bn2_g"], p["bn2_b"] = bn(d_feats, 1.2, 0.8)
    p["bn3_g"], p["bn3_b"] = bn(d_feats, 0.9, 1.1)
    p["q_w"], p["q_b"] = lin(keys[2], d_feats, d_feats)
    p["k_w"], p["k_b"] = lin(keys[3], d_feats, d_feats)
    p["v_w"], p["v_b"] = lin(keys[4], d_feats, d_feats)
    p["d1_w"], p["d1_b"] = lin(keys[5], d_points, d_points)
    p["d2_w"], p["d2_b"] = lin(keys[6], d_feats, d_points)
    p["bnd_g"], p["bnd_b"] = bn(d_points, 0.9, 1.1)
    p["g1_w"], p["g1_b"] = lin(keys[7], d_feats, d_feats)
    p["g2_w"], p["g2_b"] = lin(keys[8], d_feats, d_feats)
    p["bg1_g"], p["bg1_b"] = bn(d_feats, 1.1, 0.9)
    p["bg2_g"], p["bg2_b"] = bn(d_feats, 0.85, 1.15)
    return p


def point_transformer_block_ref(params, feats, points, k_neighbors):
    hp = jax.lax.Precision.HIGHEST

    def lin(x, w, b):
        return jnp.einsum("...i,oi->...o", x, w, precision=hp) + b

    def bn(x, g, bt):  # training-mode batch stats over all leading dims, per channel
        axes = tuple(range(x.ndim - 1))
        mean = x.mean(axis=axes)
        var = ((x - mean) ** 2).mean(axis=axes)
        return (x - mean) / jnp.sqrt(var + BN_EPS) * g + bt

    f = _gelu(bn(lin(feats, params["fc1_w"], params["fc1_b"]),
                 params["bn1_g"], params["bn1_b"]))

    d2 = jnp.sum((points[:, :, None, :] - points[:, None, :, :]) ** 2, axis=-1)
    _, idx = jax.lax.top_k(-d2, k_neighbors)  # (B, N, k), nearest (incl. self) first

    def gather(x, idx):
        BB, NN, kk = idx.shape
        return jnp.take_along_axis(
            x, idx.reshape(BB, NN * kk)[..., None], axis=1).reshape(BB, NN, kk, -1)

    knn_points = gather(points, idx)
    pos = points[:, :, None, :] - knn_points
    p1 = _gelu(bn(lin(pos, params["d1_w"], params["d1_b"]),
                  params["bnd_g"], params["bnd_b"]))
    pos_enc = lin(p1, params["d2_w"], params["d2_b"])

    q = lin(f, params["q_w"], params["q_b"])
    knn_f = gather(f, idx)
    key = lin(knn_f, params["k_w"], params["k_b"])
    value = lin(knn_f, params["v_w"], params["v_b"])

    gamma = q[:, :, None, :] - key + pos_enc
    gamma = _gelu(bn(gamma, params["bg1_g"], params["bg1_b"]))
    gamma = lin(gamma, params["g1_w"], params["g1_b"])
    gamma = _gelu(bn(gamma, params["bg2_g"], params["bg2_b"]))
    gamma = lin(gamma, params["g2_w"], params["g2_b"])
    rho = jax.nn.softmax(gamma, axis=2)
    attn = jnp.sum(rho * (value + pos_enc), axis=2)

    h = _gelu(bn(attn, params["bn2_g"], params["bn2_b"]))
    h = lin(h, params["fc2_w"], params["fc2_b"])
    h = _gelu(bn(h, params["bn3_g"], params["bn3_b"]))
    return feats + h, points


if __name__ == "__main__":
    B, N = 2, 64
    d_points, d_feats, k = 3, 16, 4

    key = jax.random.PRNGKey(0)
    kf, kp, kpar = jax.random.split(key, 3)
    feats = jax.random.normal(kf, (B, N, d_feats), jnp.float32)
    points = jax.random.normal(kp, (B, N, d_points), jnp.float32)
    params = init_params(kpar, d_points, d_feats)

    out, out_pts = point_transformer_block(params, feats, points, k)
    out = jax.block_until_ready(out)

    ref, _ = point_transformer_block_ref(params, feats, points, k)
    assert out.shape == (B, N, d_feats)
    max_err = float(jnp.max(jnp.abs(out - ref)))
    assert jnp.allclose(out, ref, rtol=2e-3, atol=2e-3), f"mismatch vs reference: {max_err}"
    assert jnp.allclose(out_pts, points)

    print("KERNEL_OK")
</pallas_src>

<mosaic_0001>
module attributes {stable_mosaic.version = 11 : i64} {
  func.func @_linear_pstats_kernel(%arg0: i32, %arg1: memref<128x16xf32, #tpu.memory_space<vmem>>, %arg2: memref<16x16xf32, #tpu.memory_space<vmem>>, %arg3: memref<1x16xf32, #tpu.memory_space<vmem>>, %arg4: memref<128x16xf32, #tpu.memory_space<vmem>>, %arg5: memref<1x1x16xf32, #tpu.memory_space<vmem>>, %arg6: memref<1x1x16xf32, #tpu.memory_space<vmem>>) attributes {dimension_semantics = [#tpu.dimension_semantics<parallel>], iteration_bounds = array<i64: 1>, scalar_prefetch = 0 : i64, scratch_operands = 0 : i64, tpu.core_type = #tpu.core_type<tc>, window_params = [{transform_indices = @transform_0, window_bounds = array<i64: 128, 16>}, {pipeline_mode = #tpu.pipeline_mode<synchronous>, transform_indices = @transform_1, window_bounds = array<i64: 16, 16>}, {pipeline_mode = #tpu.pipeline_mode<synchronous>, transform_indices = @transform_2, window_bounds = array<i64: 1, 16>}, {transform_indices = @transform_3, window_bounds = array<i64: 128, 16>}, {transform_indices = @transform_4, window_bounds = array<i64: 1, 1, 16>}, {transform_indices = @transform_5, window_bounds = array<i64: 1, 1, 16>}]} {
    %c0 = arith.constant 0 : index
    %c0_0 = arith.constant 0 : index
    %0 = vector.load %arg1[%c0, %c0_0] : memref<128x16xf32, #tpu.memory_space<vmem>>, vector<128x16xf32>
    %c0_1 = arith.constant 0 : index
    %c0_2 = arith.constant 0 : index
    %1 = vector.load %arg2[%c0_1, %c0_2] : memref<16x16xf32, #tpu.memory_space<vmem>>, vector<16x16xf32>
    %cst = arith.constant dense<0.000000e+00> : vector<128x16xf32>
    %2 = tpu.matmul %0, %1, %cst {dimension_numbers = #tpu.dot_dimension_numbers<[1], [0], [0], [1], [0, 0, 1, 1], [], []>} : vector<128x16xf32>, vector<16x16xf32>, vector<128x16xf32> -> vector<128x16xf32>
    %c0_3 = arith.constant 0 : index
    %c0_4 = arith.constant 0 : index
    %3 = vector.load %arg3[%c0_3, %c0_4] : memref<1x16xf32, #tpu.memory_space<vmem>>, vector<1x16xf32>
    %4 = vector.broadcast %3 : vector<1x16xf32> to vector<128x16xf32>
    %5 = arith.addf %2, %4 : vector<128x16xf32>
    %c0_5 = arith.constant 0 : index
    %c0_6 = arith.constant 0 : index
    %6 = vector.load %arg4[%c0_5, %c0_6] : memref<128x16xf32, #tpu.memory_space<vmem>>, vector<128x16xf32>
    tpu.vector_store %arg4[%c0_5, %c0_6], %5 {strides = array<i32>} : memref<128x16xf32, #tpu.memory_space<vmem>>, vector<128x16xf32>,
    %c128_i32 = arith.constant 128 : i32
    %7 = arith.muli %arg0, %c128_i32 : i32
    %8 = tpu.iota {dimensions = array<i32: 0>} : vector<128x1xi32>
    %9 = vector.broadcast %7 : i32 to vector<128x1xi32>
    %10 = arith.addi %9, %8 : vector<128x1xi32>
    %c128_i32_7 = arith.constant 128 : i32
    %11 = vector.broadcast %c128_i32_7 : i32 to vector<128x1xi32>
    %12 = arith.cmpi slt, %10, %11 : vector<128x1xi32>
    %13 = arith.extui %12 : vector<128x1xi1> to vector<128x1xi32>
    %14 = arith.sitofp %13 : vector<128x1xi32> to vector<128x1xf32>
    %15 = vector.broadcast %14 : vector<128x1xf32> to vector<128x16xf32>
    %16 = arith.mulf %5, %15 : vector<128x16xf32>
    %cst_8 = arith.constant dense<0.000000e+00> : vector<16xf32>
    %17 = vector.multi_reduction <add>, %16, %cst_8 [0] : vector<128x16xf32> to vector<16xf32>
    %18 = vector.shape_cast %17 : vector<16xf32> to vector<1x16xf32>
    %19 = vector.shape_cast %18 : vector<1x16xf32> to vector<1x1x16xf32>
    %c0_9 = arith.constant 0 : index
    %c0_10 = arith.constant 0 : index
    %c0_11 = arith.constant 0 : index
    %20 = vector.load %arg5[%c0_9, %c0_10, %c0_11] : memref<1x1x16xf32, #tpu.memory_space<vmem>>, vector<1x1x16xf32>
    tpu.vector_store %arg5[%c0_9, %c0_10, %c0_11], %19 {strides = array<i32>} : memref<1x1x16xf32, #tpu.memory_space<vmem>>, vector<1x1x16xf32>,
    %21 = arith.mulf %16, %5 : vector<128x16xf32>
    %cst_12 = arith.constant dense<0.000000e+00> : vector<16xf32>
    %22 = vector.multi_reduction <add>, %21, %cst_12 [0] : vector<128x16xf32> to vector<16xf32>
    %23 = vector.shape_cast %22 : vector<16xf32> to vector<1x16xf32>
    %24 = vector.shape_cast %23 : vector<1x16xf32> to vector<1x1x16xf32>
    %c0_13 = arith.constant 0 : index
    %c0_14 = arith.constant 0 : index
    %c0_15 = arith.constant 0 : index
    %25 = vector.load %arg6[%c0_13, %c0_14, %c0_15] : memref<1x1x16xf32, #tpu.memory_space<vmem>>, vector<1x1x16xf32>
    tpu.vector_store %arg6[%c0_13, %c0_14, %c0_15], %24 {strides = array<i32>} : memref<1x1x16xf32, #tpu.memory_space<vmem>>, vector<1x1x16xf32>,
    return
  }
  func.func @transform_0(%arg0: i32) -> (i32, i32) {
    %c0_i32 = arith.constant 0 : i32
    %c0_i32_0 = arith.constant 0 : i32
    return %arg0, %c0_i32 : i32, i32
  }
  func.func @transform_1(%arg0: i32) -> (i32, i32) {
    %c0_i32 = arith.constant 0 : i32
    %c0_i32_0 = arith.constant 0 : i32
    %c0_i32_1 = arith.constant 0 : i32
    return %c0_i32, %c0_i32_0 : i32, i32
  }
  func.func @transform_2(%arg0: i32) -> (i32, i32) {
    %c0_i32 = arith.constant 0 : i32
    %c0_i32_0 = arith.constant 0 : i32
    %c0_i32_1 = arith.constant 0 : i32
    return %c0_i32, %c0_i32_0 : i32, i32
  }
  func.func @transform_3(%arg0: i32) -> (i32, i32) {
    %c0_i32 = arith.constant 0 : i32
    %c0_i32_0 = arith.constant 0 : i32
    return %arg0, %c0_i32 : i32, i32
  }
  func.func @transform_4(%arg0: i32) -> (i32, i32, i32) {
    %c0_i32 = arith.constant 0 : i32
    %c0_i32_0 = arith.constant 0 : i32
    %c0_i32_1 = arith.constant 0 : i32
    return %arg0, %c0_i32, %c0_i32_0 : i32, i32, i32
  }
  func.func @transform_5(%arg0: i32) -> (i32, i32, i32) {
    %c0_i32 = arith.constant 0 : i32
    %c0_i32_0 = arith.constant 0 : i32
    %c0_i32_1 = arith.constant 0 : i32
    return %arg0, %c0_i32, %c0_i32_0 : i32, i32, i32
  }
}

</mosaic_0001>

<llo_original>
// kernel: tpu_custom_call.1
$region0: #{tpu_custom_call.1}
  #allocation0 [shape = 'u32[]', space=smem, size = 0x4, offset = 0x4, fixed_abs, tag = 'smem constant byte address 0x4 - core index']
  #allocation1 [shape = 'u32[144,128]{1,0:T(1,128)}', space=vmem, size = 0x12000, scoped, tag = 'internal scratch']
  %s0 = inlined_call_operand.vmem [shape: f32[128,16], index: 0, kind: input, shape index: {}]
  %s1 = inlined_call_operand.vmem [shape: f32[16,16], index: 1, kind: input, shape index: {}]
  %s2 = inlined_call_operand.vmem [shape: f32[1,16], index: 2, kind: input, shape index: {}]
  %s3 = inlined_call_operand.vmem [shape: f32[128,16], index: 3, kind: output, shape index: {0}]
  %s4 = inlined_call_operand.hbm [shape: f32[1,1,16], index: 4, kind: output, shape index: {1}]
  %s5 = inlined_call_operand.hbm [shape: f32[1,1,16], index: 5, kind: output, shape index: {2}]
  %6 = xla_tuple %s3, %s4, %s5
  %s7 = sld [smem:[#allocation0]]
  $region38: #{tpu_custom_call.1} parent=0
    _
  %s9 = ssub.s32 1, %s7
  %s10 = scalar_select 0, %s9, %s7
  $region1: #{tpu_custom_call.1} parent=0
    #allocation2 [shape = 'u8[512]{0}', space=vmem, size = 0x400, scoped, tag = 'output window, operand 1, single buffered']
    #allocation3 [shape = 's32[1]{0}', space=sflag, size = 0x4, scoped, tag = 'scoped memory for tpu_custom_call.1']
    #allocation4 [shape = 'u8[512]{0}', space=vmem, size = 0x400, scoped, tag = 'output window, operand 2, single buffered']
    #allocation5 [shape = 's32[1]{0}', space=sflag, size = 0x4, scoped, tag = 'scoped memory for tpu_custom_call.1']
    %11 = vsyncpa [#allocation3], 0
    %12 = vsyncpa [#allocation5], 0
    // Predicated region
    $region2: #{tpu_custom_call.1} parent=1 // pred_check
      _
    $region3: #{tpu_custom_call.1} parent=1 // pred_check_branch
      %14 = sbr.rel (0) target = $region5
    $region4: #{tpu_custom_call.1} parent=1 // pred_region
      _
    $region5: #{tpu_custom_call.1} parent=1 // pred_fallthru
      _
    // Predicated region
    $region6: #{tpu_custom_call.1} parent=1 // pred_check
      _
    $region7: #{tpu_custom_call.1} parent=1 // pred_check_branch
      %16 = sbr.rel (0) target = $region9
    $region8: #{tpu_custom_call.1} parent=1 // pred_region
      _
    $region9: #{tpu_custom_call.1} parent=1 // pred_fallthru
      _
    // Predicated region
    $region10: #{tpu_custom_call.1} parent=1 // pred_check
      _
    $region11: #{tpu_custom_call.1} parent=1 // pred_check_branch
      %18 = sbr.rel (0) target = $region13
    $region12: #{tpu_custom_call.1} parent=1 // pred_region
      _
    $region13: #{tpu_custom_call.1} parent=1 // pred_fallthru
      _
    %v19 = vld [vmem:[%s0] sm:$0xff]
    %v20 = vld [vmem:[%s0 + $0x8] sm:$0xff]
    %v21 = vld [vmem:[%s0 + $0x10] sm:$0xff]
    %v22 = vld [vmem:[%s0 + $0x18] sm:$0xff]
    %v23 = vld [vmem:[%s0 + $0x20] sm:$0xff]
    %v24 = vld [vmem:[%s0 + $0x28] sm:$0xff]
    %v25 = vld [vmem:[%s0 + $0x30] sm:$0xff]
    %v26 = vld [vmem:[%s0 + $0x38] sm:$0xff]
    %v27 = vld [vmem:[%s0 + $0x40] sm:$0xff]
    %v28 = vld [vmem:[%s0 + $0x48] sm:$0xff]
    %v29 = vld [vmem:[%s0 + $0x50] sm:$0xff]
    %v30 = vld [vmem:[%s0 + $0x58] sm:$0xff]
    %v31 = vld [vmem:[%s0 + $0x60] sm:$0xff]
    %v32 = vld [vmem:[%s0 + $0x68] sm:$0xff]
    %v33 = vld [vmem:[%s0 + $0x70] sm:$0xff]
    %v34 = vld [vmem:[%s0 + $0x78] sm:$0xff]
    %v35 = vld [vmem:[%s1] sm:$0xff]
    %v36 = vld [vmem:[%s1 + $0x8] sm:$0xff]
    %v37 = vld [vmem:[%s2] sm:$0x1]
    %v39 = vlaneseq
    %v40 = vshrl.u32 %v39, 7
    %v41 = vsub.s32 0, %v40
    %v42 = vrot.slane %v37, %v41
    %vm44 = vcmask 130048
    %v46 = vsel %vm44, %v19, 0
    %v49 = vsel %vm44, %v20, 0
    %v52 = vsel %vm44, %v21, 0
    %v55 = vsel %vm44, %v22, 0
    %v58 = vsel %vm44, %v23, 0
    %v61 = vsel %vm44, %v24, 0
    %v64 = vsel %vm44, %v25, 0
    %v67 = vsel %vm44, %v26, 0
    %v70 = vsel %vm44, %v27, 0
    %v73 = vsel %vm44, %v28, 0
    %v76 = vsel %vm44, %v29, 0
    %v79 = vsel %vm44, %v30, 0
    %v82 = vsel %vm44, %v31, 0
    %v85 = vsel %vm44, %v32, 0
    %v88 = vsel %vm44, %v33, 0
    %v91 = vsel %vm44, %v34, 0
    %93 = vmatprep.subr.mxu0 0.0
    %94 = vmatpush1.msra.mxu0 0.0
    %95 = vmatprep.subr.mxu0 0.0
    %96 = vmatpush1.msra.mxu0 0.0
    %97 = vmatprep.subr.mxu0 0.0
    %98 = vmatpush1.msra.mxu0 0.0
    %99 = vmatprep.subr.mxu0 0.0
    %100 = vmatpush1.msra.mxu0 0.0
    %101 = vmatprep.subr.mxu0 0.0
    %102 = vmatpush1.msra.mxu0 0.0
    %103 = vmatprep.subr.mxu0 0.0
    %104 = vmatpush1.msra.mxu0 0.0
    %105 = vmatprep.subr.mxu0 0.0
    %106 = vmatpush1.msra.mxu0 0.0
    %107 = vmatprep.subr.mxu0 0.0
    %108 = vmatpush1.msra.mxu0 0.0
    %109 = vmatprep.subr.mxu0 0.0
    %110 = vmatpush1.msra.mxu0 0.0
    %111 = vmatprep.subr.mxu0 0.0
    %112 = vmatpush1.msra.mxu0 0.0
    %113 = vmatprep.subr.mxu0 0.0
    %114 = vmatpush1.msra.mxu0 0.0
    %115 = vmatprep.subr.mxu0 0.0
    %116 = vmatpush1.msra.mxu0 0.0
    %117 = vmatprep.subr.mxu0 0.0
    %118 = vmatpush1.msra.mxu0 0.0
    %119 = vmatprep.subr.mxu0 0.0
    %120 = vmatpush1.msra.mxu0 0.0
    %121 = vmatprep.subr.mxu0 0.0
    %122 = vmatpush1.msra.mxu0 %v36
    %123 = vmatprep.subr.mxu0 0.0
    %124 = vmatpush1.msra.mxu0 %v35
    %125 = vmatprep.subr.mxu0 0.0
    %126 = vmatpush2.msra.mxu0 0.0
    %127 = vmatprep.subr.mxu0 0.0
    %128 = vmatpush2.msra.mxu0 0.0
    %129 = vmatprep.subr.mxu0 0.0
    %130 = vmatpush2.msra.mxu0 0.0
    %131 = vmatprep.subr.mxu0 0.0
    %132 = vmatpush2.msra.mxu0 0.0
    %133 = vmatprep.subr.mxu0 0.0
    %134 = vmatpush2.msra.mxu0 0.0
    %135 = vmatprep.subr.mxu0 0.0
    %136 = vmatpush2.msra.mxu0 0.0
    %137 = vmatprep.subr.mxu0 0.0
    %138 = vmatpush2.msra.mxu0 0.0
    %139 = vmatprep.subr.mxu0 0.0
    %140 = vmatpush2.msra.mxu0 0.0
    %141 = vmatprep.subr.mxu0 0.0
    %142 = vmatpush2.msra.mxu0 0.0
    %143 = vmatprep.subr.mxu0 0.0
    %144 = vmatpush2.msra.mxu0 0.0
    %145 = vmatprep.subr.mxu0 0.0
    %146 = vmatpush2.msra.mxu0 0.0
    %147 = vmatprep.subr.mxu0 0.0
    %148 = vmatpush2.msra.mxu0 0.0
    %149 = vmatprep.subr.mxu0 0.0
    %150 = vmatpush2.msra.mxu0 0.0
    %151 = vmatprep.subr.mxu0 0.0
    %152 = vmatpush2.msra.mxu0 0.0
    %153 = vmatprep.subr.mxu0 0.0
    %154 = vmatpush2.msra.mxu0 0.0
    %155 = vmatprep.subr.mxu0 0.0
    %156 = vmatpush2.msra.mxu0 0.0
    %157 = vmatprep.mubr.f32.mxu0 0.0
    %158 = vmatmul.mubr.f32.gmra.mxu0 %v46
    %v159 = vpop.f32.mrf.mxu0
    %v160 = vadd.f32 %v42, %v159
    %v161 = vpop.f32.mrf.mxu0
    %162 = vmatprep.mubr.f32.mxu0 0.0
    %163 = vmatmul.mubr.f32.gmra.mxu0 %v49
    %v164 = vpop.f32.mrf.mxu0
    %v165 = vadd.f32 %v42, %v164
    %v166 = vpop.f32.mrf.mxu0
    %167 = vmatprep.mubr.f32.mxu0 0.0
    %168 = vmatmul.mubr.f32.gmra.mxu0 %v52
    %v169 = vpop.f32.mrf.mxu0
    %v170 = vadd.f32 %v42, %v169
    %v171 = vpop.f32.mrf.mxu0
    %172 = vmatprep.mubr.f32.mxu0 0.0
    %173 = vmatmul.mubr.f32.gmra.mxu0 %v55
    %v174 = vpop.f32.mrf.mxu0
    %v175 = vadd.f32 %v42, %v174
    %v176 = vpop.f32.mrf.mxu0
    %177 = vmatprep.mubr.f32.mxu0 0.0
    %178 = vmatmul.mubr.f32.gmra.mxu0 %v58
    %v179 = vpop.f32.mrf.mxu0
    %v180 = vadd.f32 %v42, %v179
    %v181 = vpop.f32.mrf.mxu0
    %182 = vmatprep.mubr.f32.mxu0 0.0
    %183 = vmatmul.mubr.f32.gmra.mxu0 %v61
    %v184 = vpop.f32.mrf.mxu0
    %v185 = vadd.f32 %v42, %v184
    %v186 = vpop.f32.mrf.mxu0
    %187 = vmatprep.mubr.f32.mxu0 0.0
    %188 = vmatmul.mubr.f32.gmra.mxu0 %v64
    %v189 = vpop.f32.mrf.mxu0
    %v190 = vadd.f32 %v42, %v189
    %v191 = vpop.f32.mrf.mxu0
    %192 = vmatprep.mubr.f32.mxu0 0.0
    %193 = vmatmul.mubr.f32.gmra.mxu0 %v67
    %v194 = vpop.f32.mrf.mxu0
    %v195 = vadd.f32 %v42, %v194
    %v196 = vpop.f32.mrf.mxu0
    %197 = vmatprep.mubr.f32.mxu0 0.0
    %198 = vmatmul.mubr.f32.gmra.mxu0 %v70
    %v199 = vpop.f32.mrf.mxu0
    %v200 = vadd.f32 %v42, %v199
    %v201 = vpop.f32.mrf.mxu0
    %202 = vmatprep.mubr.f32.mxu0 0.0
    %203 = vmatmul.mubr.f32.gmra.mxu0 %v73
    %v204 = vpop.f32.mrf.mxu0
    %v205 = vadd.f32 %v42, %v204
    %v206 = vpop.f32.mrf.mxu0
    %207 = vmatprep.mubr.f32.mxu0 0.0
    %208 = vmatmul.mubr.f32.gmra.mxu0 %v76
    %v209 = vpop.f32.mrf.mxu0
    %v210 = vadd.f32 %v42, %v209
    %v211 = vpop.f32.mrf.mxu0
    %212 = vmatprep.mubr.f32.mxu0 0.0
    %213 = vmatmul.mubr.f32.gmra.mxu0 %v79
    %v214 = vpop.f32.mrf.mxu0
    %v215 = vadd.f32 %v42, %v214
    %v216 = vpop.f32.mrf.mxu0
    %217 = vmatprep.mubr.f32.mxu0 0.0
    %218 = vmatmul.mubr.f32.gmra.mxu0 %v82
    %v219 = vpop.f32.mrf.mxu0
    %v220 = vadd.f32 %v42, %v219
    %v221 = vpop.f32.mrf.mxu0
    %222 = vmatprep.mubr.f32.mxu0 0.0
    %223 = vmatmul.mubr.f32.gmra.mxu0 %v85
    %v224 = vpop.f32.mrf.mxu0
    %v225 = vadd.f32 %v42, %v224
    %v226 = vpop.f32.mrf.mxu0
    %227 = vmatprep.mubr.f32.mxu0 0.0
    %228 = vmatmul.mubr.f32.gmra.mxu0 %v88
    %v229 = vpop.f32.mrf.mxu0
    %v230 = vadd.f32 %v42, %v229
    %v231 = vpop.f32.mrf.mxu0
    %232 = vmatprep.mubr.f32.mxu0 0.0
    %233 = vmatmul.mubr.f32.gmra.mxu0 %v91
    %v234 = vpop.f32.mrf.mxu0
    %v235 = vadd.f32 %v42, %v234
    %v236 = vpop.f32.mrf.mxu0
    %237 = vdwg.mxu0
    %238 = vst.msk [vmem:[%s3] sm:$0xff] %vm44, %v160
    %239 = vst.msk [vmem:[%s3 + $0x8] sm:$0xff] %vm44, %v165
    %240 = vst.msk [vmem:[%s3 + $0x10] sm:$0xff] %vm44, %v170
    %241 = vst.msk [vmem:[%s3 + $0x18] sm:$0xff] %vm44, %v175
    %242 = vst.msk [vmem:[%s3 + $0x20] sm:$0xff] %vm44, %v180
    %243 = vst.msk [vmem:[%s3 + $0x28] sm:$0xff] %vm44, %v185
    %244 = vst.msk [vmem:[%s3 + $0x30] sm:$0xff] %vm44, %v190
    %245 = vst.msk [vmem:[%s3 + $0x38] sm:$0xff] %vm44, %v195
    %246 = vst.msk [vmem:[%s3 + $0x40] sm:$0xff] %vm44, %v200
    %247 = vst.msk [vmem:[%s3 + $0x48] sm:$0xff] %vm44, %v205
    %248 = vst.msk [vmem:[%s3 + $0x50] sm:$0xff] %vm44, %v210
    %249 = vst.msk [vmem:[%s3 + $0x58] sm:$0xff] %vm44, %v215
    %250 = vst.msk [vmem:[%s3 + $0x60] sm:$0xff] %vm44, %v220
    %251 = vst.msk [vmem:[%s3 + $0x68] sm:$0xff] %vm44, %v225
    %252 = vst.msk [vmem:[%s3 + $0x70] sm:$0xff] %vm44, %v230
    %253 = vst.msk [vmem:[%s3 + $0x78] sm:$0xff] %vm44, %v235
    %s254 = smul.u32 0, 128
    %v255 = vlaneseq
    %v256 = vshrl.u32 %v255, 7
    %v257 = vadd.s32 %v256, 8
    %v258 = vadd.s32 %v256, 16
    %v259 = vadd.s32 %v256, 24
    %v260 = vadd.s32 %v256, 32
    %v261 = vadd.s32 %v256, 40
    %v262 = vadd.s32 %v256, 48
    %v263 = vadd.s32 %v256, 56
    %v264 = vadd.s32 %v256, 64
    %v265 = vadd.s32 %v256, 72
    %v266 = vadd.s32 %v256, 80
    %v267 = vadd.s32 %v256, 88
    %v268 = vadd.s32 %v256, 96
    %v269 = vadd.s32 %v256, 104
    %v270 = vadd.s32 %v256, 112
    %v271 = vadd.s32 %v256, 120
    %v272 = vstv %s254
    %v273 = vadd.s32 %v272, %v256
    %v274 = vadd.s32 %v272, %v257
    %v275 = vadd.s32 %v272, %v258
    %v276 = vadd.s32 %v272, %v259
    %v277 = vadd.s32 %v272, %v260
    %v278 = vadd.s32 %v272, %v261
    %v279 = vadd.s32 %v272, %v262
    %v280 = vadd.s32 %v272, %v263
    %v281 = vadd.s32 %v272, %v264
    %v282 = vadd.s32 %v272, %v265
    %v283 = vadd.s32 %v272, %v266
    %v284 = vadd.s32 %v272, %v267
    %v285 = vadd.s32 %v272, %v268
    %v286 = vadd.s32 %v272, %v269
    %v287 = vadd.s32 %v272, %v270
    %v288 = vadd.s32 %v272, %v271
    %vm289 = vcmp.lt.s32.totalorder %v273, 128
    %vm290 = vcmp.lt.s32.totalorder %v274, 128
    %vm291 = vcmp.lt.s32.totalorder %v275, 128
    %vm292 = vcmp.lt.s32.totalorder %v276, 128
    %vm293 = vcmp.lt.s32.totalorder %v277, 128
    %vm294 = vcmp.lt.s32.totalorder %v278, 128
    %vm295 = vcmp.lt.s32.totalorder %v279, 128
    %vm296 = vcmp.lt.s32.totalorder %v280, 128
    %vm297 = vcmp.lt.s32.totalorder %v281, 128
    %vm298 = vcmp.lt.s32.totalorder %v282, 128
    %vm299 = vcmp.lt.s32.totalorder %v283, 128
    %vm300 = vcmp.lt.s32.totalorder %v284, 128
    %vm301 = vcmp.lt.s32.totalorder %v285, 128
    %vm302 = vcmp.lt.s32.totalorder %v286, 128
    %vm303 = vcmp.lt.s32.totalorder %v287, 128
    %vm304 = vcmp.lt.s32.totalorder %v288, 128
    %v305 = vsel %vm289, 1, 0
    %v306 = vsel %vm290, 1, 0
    %v307 = vsel %vm291, 1, 0
    %v308 = vsel %vm292, 1, 0
    %v309 = vsel %vm293, 1, 0
    %v310 = vsel %vm294, 1, 0
    %v311 = vsel %vm295, 1, 0
    %v312 = vsel %vm296, 1, 0
    %v313 = vsel %vm297, 1, 0
    %v314 = vsel %vm298, 1, 0
    %v315 = vsel %vm299, 1, 0
    %v316 = vsel %vm300, 1, 0
    %v317 = vsel %vm301, 1, 0
    %v318 = vsel %vm302, 1, 0
    %v319 = vsel %vm303, 1, 0
    %v320 = vsel %vm304, 1, 0
    %v321 = vcvt.s32.f32 %v305
    %v322 = vcvt.s32.f32 %v306
    %v323 = vcvt.s32.f32 %v307
    %v324 = vcvt.s32.f32 %v308
    %v325 = vcvt.s32.f32 %v309
    %v326 = vcvt.s32.f32 %v310
    %v327 = vcvt.s32.f32 %v311
    %v328 = vcvt.s32.f32 %v312
    %v329 = vcvt.s32.f32 %v313
    %v330 = vcvt.s32.f32 %v314
    %v331 = vcvt.s32.f32 %v315
    %v332 = vcvt.s32.f32 %v316
    %v333 = vcvt.s32.f32 %v317
    %v334 = vcvt.s32.f32 %v318
    %v335 = vcvt.s32.f32 %v319
    %v336 = vcvt.s32.f32 %v320
    %v337 = vmul.f32 %v160, %v321
    %v338 = vmul.f32 %v165, %v322
    %v339 = vmul.f32 %v170, %v323
    %v340 = vmul.f32 %v175, %v324
    %v341 = vmul.f32 %v180, %v325
    %v342 = vmul.f32 %v185, %v326
    %v343 = vmul.f32 %v190, %v327
    %v344 = vmul.f32 %v195, %v328
    %v345 = vmul.f32 %v200, %v329
    %v346 = vmul.f32 %v205, %v330
    %v347 = vmul.f32 %v210, %v331
    %v348 = vmul.f32 %v215, %v332
    %v349 = vmul.f32 %v220, %v333
    %v350 = vmul.f32 %v225, %v334
    %v351 = vmul.f32 %v230, %v335
    %v352 = vmul.f32 %v235, %v336
    %v353 = vsel %vm44, %v337, 0.0
    %v354 = vsel %vm44, %v338, 0.0
    %v355 = vadd.f32 %v353, %v354
    %v356 = vsel %vm44, %v339, 0.0
    %v357 = vadd.f32 %v355, %v356
    %v358 = vsel %vm44, %v340, 0.0
    %v359 = vadd.f32 %v357, %v358
    %v360 = vsel %vm44, %v341, 0.0
    %v361 = vadd.f32 %v359, %v360
    %v362 = vsel %vm44, %v342, 0.0
    %v363 = vadd.f32 %v361, %v362
    %v364 = vsel %vm44, %v343, 0.0
    %v365 = vadd.f32 %v363, %v364
    %v366 = vsel %vm44, %v344, 0.0
    %v367 = vadd.f32 %v365, %v366
    %v368 = vsel %vm44, %v345, 0.0
    %v369 = vadd.f32 %v367, %v368
    %v370 = vsel %vm44, %v346, 0.0
    %v371 = vadd.f32 %v369, %v370
    %v372 = vsel %vm44, %v347, 0.0
    %v373 = vadd.f32 %v371, %v372
    %v374 = vsel %vm44, %v348, 0.0
    %v375 = vadd.f32 %v373, %v374
    %v376 = vsel %vm44, %v349, 0.0
    %v377 = vadd.f32 %v375, %v376
    %v378 = vsel %vm44, %v350, 0.0
    %v379 = vadd.f32 %v377, %v378
    %v380 = vsel %vm44, %v351, 0.0
    %v381 = vadd.f32 %v379, %v380
    %v382 = vsel %vm44, %v352, 0.0
    %v383 = vadd.f32 %v381, %v382
    %v384 = vrot.slane %v383, 4
    %v385 = vadd.f32 %v383, %v384
    %v386 = vrot.slane %v385, 2
    %v387 = vadd.f32 %v385, %v386
    %v388 = vrot.slane %v387, 1
    %v389 = vadd.f32 %v387, %v388
    %vm390 = vcmask 122880
    %391 = vst.msk [vmem:[#allocation2] sm:$0x1] %vm390, %v389
    %v392 = vmul.f32 %v337, %v160
    %v393 = vmul.f32 %v338, %v165
    %v394 = vmul.f32 %v339, %v170
    %v395 = vmul.f32 %v340, %v175
    %v396 = vmul.f32 %v341, %v180
    %v397 = vmul.f32 %v342, %v185
    %v398 = vmul.f32 %v343, %v190
    %v399 = vmul.f32 %v344, %v195
    %v400 = vmul.f32 %v345, %v200
    %v401 = vmul.f32 %v346, %v205
    %v402 = vmul.f32 %v347, %v210
    %v403 = vmul.f32 %v348, %v215
    %v404 = vmul.f32 %v349, %v220
    %v405 = vmul.f32 %v350, %v225
    %v406 = vmul.f32 %v351, %v230
    %v407 = vmul.f32 %v352, %v235
    %v408 = vsel %vm44, %v392, 0.0
    %v409 = vsel %vm44, %v393, 0.0
    %v410 = vadd.f32 %v408, %v409
    %v411 = vsel %vm44, %v394, 0.0
    %v412 = vadd.f32 %v410, %v411
    %v413 = vsel %vm44, %v395, 0.0
    %v414 = vadd.f32 %v412, %v413
    %v415 = vsel %vm44, %v396, 0.0
    %v416 = vadd.f32 %v414, %v415
    %v417 = vsel %vm44, %v397, 0.0
    %v418 = vadd.f32 %v416, %v417
    %v419 = vsel %vm44, %v398, 0.0
    %v420 = vadd.f32 %v418, %v419
    %v421 = vsel %vm44, %v399, 0.0
    %v422 = vadd.f32 %v420, %v421
    %v423 = vsel %vm44, %v400, 0.0
    %v424 = vadd.f32 %v422, %v423
    %v425 = vsel %vm44, %v401, 0.0
    %v426 = vadd.f32 %v424, %v425
    %v427 = vsel %vm44, %v402, 0.0
    %v428 = vadd.f32 %v426, %v427
    %v429 = vsel %vm44, %v403, 0.0
    %v430 = vadd.f32 %v428, %v429
    %v431 = vsel %vm44, %v404, 0.0
    %v432 = vadd.f32 %v430, %v431
    %v433 = vsel %vm44, %v405, 0.0
    %v434 = vadd.f32 %v432, %v433
    %v435 = vsel %vm44, %v406, 0.0
    %v436 = vadd.f32 %v434, %v435
    %v437 = vsel %vm44, %v407, 0.0
    %v438 = vadd.f32 %v436, %v437
    %v439 = vrot.slane %v438, 4
    %v440 = vadd.f32 %v438, %v439
    %v441 = vrot.slane %v440, 2
    %v442 = vadd.f32 %v440, %v441
    %v443 = vrot.slane %v442, 1
    %v444 = vadd.f32 %v442, %v443
    %445 = vst.msk [vmem:[#allocation4] sm:$0x1] %vm390, %v444
    // Predicated region
    $region14: #{tpu_custom_call.1} parent=1 // pred_check
      _
    $region15: #{tpu_custom_call.1} parent=1 // pred_check_branch
      %447 = sbr.rel (0) target = $region17
    $region16: #{tpu_custom_call.1} parent=1 // pred_region
      _
    $region17: #{tpu_custom_call.1} parent=1 // pred_fallthru
      _
    // Predicated region
    $region18: #{tpu_custom_call.1} parent=1 // pred_check
      _
    $region19: #{tpu_custom_call.1} parent=1 // pred_check_branch
      %449 = sbr.rel (0) target = $region21
    $region20: #{tpu_custom_call.1} parent=1 // pred_region
      %s451 = ssub.s32 16, 16
      %452 = vsyncadd [#allocation3], %s451
      %s454 = sshll.u32 [#allocation2], 4
      %s455 = int_to_ptr.vmem [resolvable:$true] %s454
      %457 = dma.vmem_to_hbm [thread:$0]  %s455, 16, %s4, [#allocation3]
    $region21: #{tpu_custom_call.1} parent=1 // pred_fallthru
      _
    // Predicated region
    $region22: #{tpu_custom_call.1} parent=1 // pred_check
      _
    $region23: #{tpu_custom_call.1} parent=1 // pred_check_branch
      %459 = sbr.rel (0) target = $region25
    $region24: #{tpu_custom_call.1} parent=1 // pred_region
      %s461 = ssub.s32 16, 16
      %462 = vsyncadd [#allocation5], %s461
      %s464 = sshll.u32 [#allocation4], 4
      %s465 = int_to_ptr.vmem [resolvable:$true] %s464
      %467 = dma.vmem_to_hbm [thread:$0]  %s465, 16, %s5, [#allocation5]
    $region25: #{tpu_custom_call.1} parent=1 // pred_fallthru
      _
    // Predicated region
    $region26: #{tpu_custom_call.1} parent=1 // pred_check
      _
    $region27: #{tpu_custom_call.1} parent=1 // pred_check_branch
      %469 = sbr.rel (0) target = $region29
    $region28: #{tpu_custom_call.1} parent=1 // pred_region
      _
    $region29: #{tpu_custom_call.1} parent=1 // pred_fallthru
      _
    // Predicated region
    $region30: #{tpu_custom_call.1} parent=1 // pred_check
      _
    $region31: #{tpu_custom_call.1} parent=1 // pred_check_branch
      %471 = sbr.rel (0) target = $region33
    $region32: #{tpu_custom_call.1} parent=1 // pred_region
      %472 = dma.done [#allocation3], 16
    $region33: #{tpu_custom_call.1} parent=1 // pred_fallthru
      _
    // Predicated region
    $region34: #{tpu_custom_call.1} parent=1 // pred_check
      _
    $region35: #{tpu_custom_call.1} parent=1 // pred_check_branch
      %474 = sbr.rel (0) target = $region37
    $region36: #{tpu_custom_call.1} parent=1 // pred_region
      %475 = dma.done [#allocation5], 16
    $region37: #{tpu_custom_call.1} parent=1 // pred_fallthru
      _
    %476 = vsyncpa [#allocation3], 1
    %477 = vsyncpa [#allocation5], 1

</llo_original>
